<compile_context>
chip_gen: v6e
topology: v6e:2x2x1
jax: 0.10.0
libtpu: 0.0.40
codegen_flags: <defaults>
</compile_context>

<pallas_src>
import functools
from typing import NamedTuple

import jax
import jax.numpy as jnp
from jax.experimental import pallas as pl
from jax.experimental.pallas import tpu as pltpu

_LANE = 128      # last-dim vreg width
_SUBLANE = 8     # second-to-last dim granularity (f32)


def _round_up(x, m):
    return (x + m - 1) // m * m


def _physical_vmem_bytes():
    """Per-TensorCore VMEM capacity; conservative (v7x-sized) fallback."""
    try:
        return int(pltpu.get_tpu_info().vmem_capacity_bytes)
    except Exception:
        return 64 << 20


def _num_tensorcores():
    """2 on v7x-style parts (2 TensorCores / chip), else 1."""
    try:
        kind = jax.devices()[0].device_kind.lower()
    except Exception:
        return 1
    return 2 if ("v7" in kind or "7x" in kind) else 1


class PreparedMLP(NamedTuple):
    dims: tuple      # logical feature dims [in, h1, ..., out]
    pdims: tuple     # lane-dense padded feature dims (multiples of 128)
    weights: tuple   # padded weights, shape (Kp, Np), weight_dtype
    biases: tuple    # padded biases, shape (1, Np), float32


def prepare_params(params, *, weight_dtype=jnp.bfloat16):
    """Pad + cast the weights ONCE (hoisted out of the per-call path).

    params: list of (w (K, N), b (1, N) or (N,)) pairs, layer order.
    """
    dims = [params[0][0].shape[0]] + [w.shape[1] for w, _ in params]
    pdims = [_round_up(d, _LANE) for d in dims]
    weights, biases = [], []
    for i, (w, b) in enumerate(params):
        kp, np_ = pdims[i], pdims[i + 1]
        wp = (jnp.zeros((kp, np_), weight_dtype)
              .at[: w.shape[0], : w.shape[1]].set(w.astype(weight_dtype)))
        b2 = jnp.reshape(b, (1, -1)).astype(jnp.float32)
        bp = jnp.zeros((1, np_), jnp.float32).at[:, : b2.shape[1]].set(b2)
        weights.append(wp)
        biases.append(bp)
    return PreparedMLP(tuple(dims), tuple(pdims), tuple(weights), tuple(biases))


def _fused_mlp_kernel(*refs, num_layers, precision):
    """refs = (x_ref, w0, b0, ..., w_{L-1}, b_{L-1}, o_ref).

    One batch tile of the whole MLP: every matmul runs on the MXU with an f32
    accumulator; bias add + squared ReLU stay in f32 on the VPU; intermediate
    activations never leave VMEM/vregs.
    """
    x_ref, o_ref, wb = refs[0], refs[-1], refs[1:-1]
    h = x_ref[...].astype(jnp.float32)
    for i in range(num_layers):
        w = wb[2 * i][...]
        b = wb[2 * i + 1][...]                    # (1, Np) f32 -> broadcasts over batch
        y = jnp.dot(h.astype(w.dtype), w,
                    precision=precision,
                    preferred_element_type=jnp.float32)
        y = y + b
        if i < num_layers - 1:                    # squared ReLU on hidden layers only
            y = jnp.maximum(y, 0.0)
            y = y * y
        h = y
    o_ref[...] = h.astype(o_ref.dtype)


def _tile_bytes(tm, pdims, act_itemsize, out_itemsize):
    """Per-grid-step VMEM footprint excluding resident weights."""
    t = 2 * tm * pdims[0] * act_itemsize          # x tile (double-buffered)
    t += 2 * tm * pdims[-1] * out_itemsize        # out tile (double-buffered)
    t += 3 * tm * max(pdims) * 4                  # live f32 intermediates + slack
    return t


def mlp_sqrelu_forward(x, params, *, weight_dtype=jnp.bfloat16, out_dtype=None,
                       precision=None):
    """x: (B, input_dim). params: PreparedMLP (preferred; pad/cast once and
    reuse across calls) or a raw list of (w (K, N), b (1, N)) pairs."""
    if not isinstance(params, PreparedMLP):
        params = prepare_params(params, weight_dtype=weight_dtype)

    B, K0 = x.shape
    dims, pdims = params.dims, params.pdims
    assert K0 == dims[0], f"input dim mismatch: {K0} vs {dims[0]}"
    num_layers = len(params.weights)
    out_dtype = x.dtype if out_dtype is None else out_dtype

    w_itemsize = jnp.dtype(params.weights[0].dtype).itemsize
    act_itemsize = jnp.dtype(x.dtype).itemsize
    out_itemsize = jnp.dtype(out_dtype).itemsize

    phys_vmem = _physical_vmem_bytes()
    vmem_cap = int(phys_vmem * 0.85)              # ~108 MiB v5e/v6e, ~54 MiB v7x

    # Resident (single-buffered) weight + bias VMEM footprint.
    resident = sum(pdims[i] * pdims[i + 1] for i in range(num_layers)) * w_itemsize
    resident += sum(pdims[1:]) * 4
    if resident > phys_vmem // 2:
        # TODO(synk): stream oversized weights from HBM (memory_space=pl.ANY +
        # pltpu.emit_pipeline tiled over K/N) instead of keeping them resident.
        raise ValueError(
            f"padded weights need {resident / 2**20:.1f} MiB resident VMEM, too "
            f"large for the fused kernel on this TPU ({phys_vmem / 2**20:.0f} MiB/core)")

    # ----- batch tiling (generation-aware) -----
    if B <= _LANE:
        # Small batch: split across both TensorCores where the chip has two.
        n_tiles = 2 if (_num_tensorcores() >= 2 and B > _SUBLANE) else 1
        tm = _round_up(-(-B // n_tiles), _SUBLANE)
    else:
        tm = _LANE
        for cand in (512, 256, 128):
            if resident + _tile_bytes(cand, pdims, act_itemsize, out_itemsize) \
                    <= int(phys_vmem * 0.75):
                tm = cand
                break
        n_tiles = pl.cdiv(B, tm)
    Bp = n_tiles * tm

    vmem_need = resident + _tile_bytes(tm, pdims, act_itemsize, out_itemsize)
    vmem_limit = int(min(max(2 * vmem_need, 32 << 20), vmem_cap))

    # Only the activations are padded per call (weights were prepared once).
    xp = jnp.zeros((Bp, pdims[0]), x.dtype).at[:B, :K0].set(x)

    flops = 2 * Bp * sum(pdims[i] * pdims[i + 1] for i in range(num_layers))
    bytes_accessed = int(Bp * pdims[0] * act_itemsize
                         + Bp * pdims[-1] * out_itemsize + resident)
    cost = pl.CostEstimate(flops=flops, transcendentals=0,
                           bytes_accessed=bytes_accessed)

    kernel = functools.partial(_fused_mlp_kernel, num_layers=num_layers,
                               precision=precision)

    def _call(single_buffer_weights):
        in_specs = [pl.BlockSpec((tm, pdims[0]), lambda i: (i, 0))]
        operands = [xp]
        for li in range(num_layers):
            kp, np_ = pdims[li], pdims[li + 1]
            if single_buffer_weights:
                # Grid-invariant weights/biases: one VMEM buffer, DMA'd once.
                w_spec = pl.BlockSpec((kp, np_), lambda i: (0, 0),
                                      pipeline_mode=pl.Buffered(1))
                b_spec = pl.BlockSpec((1, np_), lambda i: (0, 0),
                                      pipeline_mode=pl.Buffered(1))
            else:
                w_spec = pl.BlockSpec((kp, np_), lambda i: (0, 0))
                b_spec = pl.BlockSpec((1, np_), lambda i: (0, 0))
            in_specs += [w_spec, b_spec]
            operands += [params.weights[li], params.biases[li]]
        out_specs = pl.BlockSpec((tm, pdims[-1]), lambda i: (i, 0))
        return pl.pallas_call(
            kernel,
            out_shape=jax.ShapeDtypeStruct((Bp, pdims[-1]), out_dtype),
            grid=(n_tiles,),
            in_specs=in_specs,
            out_specs=out_specs,
            compiler_params=pltpu.CompilerParams(
                dimension_semantics=("parallel",),
                vmem_limit_bytes=vmem_limit),
            cost_estimate=cost,
        )(*operands)

    try:
        out_padded = _call(single_buffer_weights=True)
    except Exception:
        # Fallback for JAX versions without BlockSpec(pipeline_mode=...):
        # default double-buffering (correct, just 2x resident-weight VMEM).
        out_padded = _call(single_buffer_weights=False)

    return out_padded[:B, : dims[-1]]


def init_params(key, input_dim, hidden_dims, output_dim, dtype=jnp.float32):
    """Mimics nn.Linear init U(-1/sqrt(fan_in), 1/sqrt(fan_in)); W stored (in, out)."""
    dims = [input_dim] + list(hidden_dims) + [output_dim]
    params = []
    for i in range(len(dims) - 1):
        key, kw, kb = jax.random.split(key, 3)
        bound = 1.0 / jnp.sqrt(dims[i])
        w = jax.random.uniform(kw, (dims[i], dims[i + 1]), dtype, -bound, bound)
        b = jax.random.uniform(kb, (1, dims[i + 1]), dtype, -bound, bound)
        params.append((w, b))
    return params


def mlp_sqrelu_reference(x, params):
    n = len(params)
    for i, (w, b) in enumerate(params):
        x = x @ w + b
        if i < n - 1:
            x = jnp.maximum(x, 0.0) ** 2
    return x


if __name__ == "__main__":
    batch = 8
    input_dim = 32
    hidden_dims = [64, 64]
    output_dim = 16

    key = jax.random.PRNGKey(0)
    key, kx = jax.random.split(key)
    x = jax.random.normal(kx, (batch, input_dim), dtype=jnp.float32)
    params = init_params(key, input_dim, hidden_dims, output_dim)
    ref = mlp_sqrelu_reference(x, params)

    # Recommended path: bf16 weights / bf16 MXU LHS, f32 accumulation + epilogue.
    prep_bf16 = prepare_params(params, weight_dtype=jnp.bfloat16)
    out = jax.block_until_ready(mlp_sqrelu_forward(x, prep_bf16))
    assert out.shape == (batch, output_dim)
    assert jnp.allclose(out, ref, atol=5e-2, rtol=5e-2), "bf16 path mismatch vs reference"

    # Strict-accuracy f32 path (weights kept in f32).
    prep_f32 = prepare_params(params, weight_dtype=jnp.float32)
    out_f32 = jax.block_until_ready(mlp_sqrelu_forward(x, prep_f32))
    assert out_f32.shape == (batch, output_dim)
    assert jnp.allclose(out_f32, ref, atol=1e-4, rtol=1e-4), "f32 path mismatch vs reference"

    print("KERNEL_OK")
</pallas_src>

<mosaic_0001>
module attributes {stable_mosaic.version = 11 : i64} {
  func.func @_fused_mlp_kernel(%arg0: i32, %arg1: memref<8x128xf32, #tpu.memory_space<vmem>>, %arg2: memref<128x128xbf16, #tpu.memory_space<vmem>>, %arg3: memref<1x128xf32, #tpu.memory_space<vmem>>, %arg4: memref<128x128xbf16, #tpu.memory_space<vmem>>, %arg5: memref<1x128xf32, #tpu.memory_space<vmem>>, %arg6: memref<128x128xbf16, #tpu.memory_space<vmem>>, %arg7: memref<1x128xf32, #tpu.memory_space<vmem>>, %arg8: memref<8x128xf32, #tpu.memory_space<vmem>>) attributes {dimension_semantics = [#tpu.dimension_semantics<parallel>], iteration_bounds = array<i64: 1>, scalar_prefetch = 0 : i64, scratch_operands = 0 : i64, tpu.core_type = #tpu.core_type<tc>, window_params = [{transform_indices = @transform_0, window_bounds = array<i64: 8, 128>}, {pipeline_mode = #tpu.pipeline_mode<synchronous>, transform_indices = @transform_1, window_bounds = array<i64: 128, 128>}, {pipeline_mode = #tpu.pipeline_mode<synchronous>, transform_indices = @transform_2, window_bounds = array<i64: 1, 128>}, {pipeline_mode = #tpu.pipeline_mode<synchronous>, transform_indices = @transform_3, window_bounds = array<i64: 128, 128>}, {pipeline_mode = #tpu.pipeline_mode<synchronous>, transform_indices = @transform_4, window_bounds = array<i64: 1, 128>}, {pipeline_mode = #tpu.pipeline_mode<synchronous>, transform_indices = @transform_5, window_bounds = array<i64: 128, 128>}, {pipeline_mode = #tpu.pipeline_mode<synchronous>, transform_indices = @transform_6, window_bounds = array<i64: 1, 128>}, {transform_indices = @transform_7, window_bounds = array<i64: 8, 128>}]} {
    %c0 = arith.constant 0 : index
    %c0_0 = arith.constant 0 : index
    %0 = vector.load %arg1[%c0, %c0_0] : memref<8x128xf32, #tpu.memory_space<vmem>>, vector<8x128xf32>
    %c0_1 = arith.constant 0 : index
    %c0_2 = arith.constant 0 : index
    %1 = vector.load %arg2[%c0_1, %c0_2] : memref<128x128xbf16, #tpu.memory_space<vmem>>, vector<128x128xbf16>
    %c0_3 = arith.constant 0 : index
    %c0_4 = arith.constant 0 : index
    %2 = vector.load %arg3[%c0_3, %c0_4] : memref<1x128xf32, #tpu.memory_space<vmem>>, vector<1x128xf32>
    %3 = arith.truncf %0 : vector<8x128xf32> to vector<8x128xbf16>
    %cst = arith.constant dense<0.000000e+00> : vector<8x128xf32>
    %4 = tpu.matmul %3, %1, %cst {dimension_numbers = #tpu.dot_dimension_numbers<[1], [0], [0], [1], [0, 0, 1, 1], [], []>} : vector<8x128xbf16>, vector<128x128xbf16>, vector<8x128xf32> -> vector<8x128xf32>
    %5 = vector.broadcast %2 : vector<1x128xf32> to vector<8x128xf32>
    %6 = arith.addf %4, %5 : vector<8x128xf32>
    %cst_5 = arith.constant 0.000000e+00 : f32
    %7 = vector.broadcast %cst_5 : f32 to vector<8x128xf32>
    %8 = arith.maximumf %6, %7 : vector<8x128xf32>
    %9 = arith.mulf %8, %8 : vector<8x128xf32>
    %c0_6 = arith.constant 0 : index
    %c0_7 = arith.constant 0 : index
    %10 = vector.load %arg4[%c0_6, %c0_7] : memref<128x128xbf16, #tpu.memory_space<vmem>>, vector<128x128xbf16>
    %c0_8 = arith.constant 0 : index
    %c0_9 = arith.constant 0 : index
    %11 = vector.load %arg5[%c0_8, %c0_9] : memref<1x128xf32, #tpu.memory_space<vmem>>, vector<1x128xf32>
    %12 = arith.truncf %9 : vector<8x128xf32> to vector<8x128xbf16>
    %cst_10 = arith.constant dense<0.000000e+00> : vector<8x128xf32>
    %13 = tpu.matmul %12, %10, %cst_10 {dimension_numbers = #tpu.dot_dimension_numbers<[1], [0], [0], [1], [0, 0, 1, 1], [], []>} : vector<8x128xbf16>, vector<128x128xbf16>, vector<8x128xf32> -> vector<8x128xf32>
    %14 = vector.broadcast %11 : vector<1x128xf32> to vector<8x128xf32>
    %15 = arith.addf %13, %14 : vector<8x128xf32>
    %cst_11 = arith.constant 0.000000e+00 : f32
    %16 = vector.broadcast %cst_11 : f32 to vector<8x128xf32>
    %17 = arith.maximumf %15, %16 : vector<8x128xf32>
    %18 = arith.mulf %17, %17 : vector<8x128xf32>
    %c0_12 = arith.constant 0 : index
    %c0_13 = arith.constant 0 : index
    %19 = vector.load %arg6[%c0_12, %c0_13] : memref<128x128xbf16, #tpu.memory_space<vmem>>, vector<128x128xbf16>
    %c0_14 = arith.constant 0 : index
    %c0_15 = arith.constant 0 : index
    %20 = vector.load %arg7[%c0_14, %c0_15] : memref<1x128xf32, #tpu.memory_space<vmem>>, vector<1x128xf32>
    %21 = arith.truncf %18 : vector<8x128xf32> to vector<8x128xbf16>
    %cst_16 = arith.constant dense<0.000000e+00> : vector<8x128xf32>
    %22 = tpu.matmul %21, %19, %cst_16 {dimension_numbers = #tpu.dot_dimension_numbers<[1], [0], [0], [1], [0, 0, 1, 1], [], []>} : vector<8x128xbf16>, vector<128x128xbf16>, vector<8x128xf32> -> vector<8x128xf32>
    %23 = vector.broadcast %20 : vector<1x128xf32> to vector<8x128xf32>
    %24 = arith.addf %22, %23 : vector<8x128xf32>
    %c0_17 = arith.constant 0 : index
    %c0_18 = arith.constant 0 : index
    %25 = vector.load %arg8[%c0_17, %c0_18] : memref<8x128xf32, #tpu.memory_space<vmem>>, vector<8x128xf32>
    tpu.vector_store %arg8[%c0_17, %c0_18], %24 {strides = array<i32>} : memref<8x128xf32, #tpu.memory_space<vmem>>, vector<8x128xf32>,
    return
  }
  func.func @transform_0(%arg0: i32) -> (i32, i32) {
    %c0_i32 = arith.constant 0 : i32
    %c0_i32_0 = arith.constant 0 : i32
    return %arg0, %c0_i32 : i32, i32
  }
  func.func @transform_1(%arg0: i32) -> (i32, i32) {
    %c0_i32 = arith.constant 0 : i32
    %c0_i32_0 = arith.constant 0 : i32
    %c0_i32_1 = arith.constant 0 : i32
    return %c0_i32, %c0_i32_0 : i32, i32
  }
  func.func @transform_2(%arg0: i32) -> (i32, i32) {
    %c0_i32 = arith.constant 0 : i32
    %c0_i32_0 = arith.constant 0 : i32
    %c0_i32_1 = arith.constant 0 : i32
    return %c0_i32, %c0_i32_0 : i32, i32
  }
  func.func @transform_3(%arg0: i32) -> (i32, i32) {
    %c0_i32 = arith.constant 0 : i32
    %c0_i32_0 = arith.constant 0 : i32
    %c0_i32_1 = arith.constant 0 : i32
    return %c0_i32, %c0_i32_0 : i32, i32
  }
  func.func @transform_4(%arg0: i32) -> (i32, i32) {
    %c0_i32 = arith.constant 0 : i32
    %c0_i32_0 = arith.constant 0 : i32
    %c0_i32_1 = arith.constant 0 : i32
    return %c0_i32, %c0_i32_0 : i32, i32
  }
  func.func @transform_5(%arg0: i32) -> (i32, i32) {
    %c0_i32 = arith.constant 0 : i32
    %c0_i32_0 = arith.constant 0 : i32
    %c0_i32_1 = arith.constant 0 : i32
    return %c0_i32, %c0_i32_0 : i32, i32
  }
  func.func @transform_6(%arg0: i32) -> (i32, i32) {
    %c0_i32 = arith.constant 0 : i32
    %c0_i32_0 = arith.constant 0 : i32
    %c0_i32_1 = arith.constant 0 : i32
    return %c0_i32, %c0_i32_0 : i32, i32
  }
  func.func @transform_7(%arg0: i32) -> (i32, i32) {
    %c0_i32 = arith.constant 0 : i32
    %c0_i32_0 = arith.constant 0 : i32
    return %arg0, %c0_i32 : i32, i32
  }
}

module attributes {stable_mosaic.version = 11 : i64} {
  func.func @_fused_mlp_kernel(%arg0: i32, %arg1: memref<8x128xf32, #tpu.memory_space<vmem>>, %arg2: memref<128x128xbf16, #tpu.memory_space<vmem>>, %arg3: memref<1x128xf32, #tpu.memory_space<vmem>>, %arg4: memref<128x128xbf16, #tpu.memory_space<vmem>>, %arg5: memref<1x128xf32, #tpu.memory_space<vmem>>, %arg6: memref<128x128xbf16, #tpu.memory_space<vmem>>, %arg7: memref<1x128xf32, #tpu.memory_space<vmem>>, %arg8: memref<8x128xf32, #tpu.memory_space<vmem>>) attributes {dimension_semantics = [#tpu.dimension_semantics<parallel>], iteration_bounds = array<i64: 1>, scalar_prefetch = 0 : i64, scratch_operands = 0 : i64, tpu.core_type = #tpu.core_type<tc>, window_params = [{transform_indices = @transform_0, window_bounds = array<i64: 8, 128>}, {pipeline_mode = #tpu.pipeline_mode<synchronous>, transform_indices = @transform_1, window_bounds = array<i64: 128, 128>}, {pipeline_mode = #tpu.pipeline_mode<synchronous>, transform_indices = @transform_2, window_bounds = array<i64: 1, 128>}, {pipeline_mode = #tpu.pipeline_mode<synchronous>, transform_indices = @transform_3, window_bounds = array<i64: 128, 128>}, {pipeline_mode = #tpu.pipeline_mode<synchronous>, transform_indices = @transform_4, window_bounds = array<i64: 1, 128>}, {pipeline_mode = #tpu.pipeline_mode<synchronous>, transform_indices = @transform_5, window_bounds = array<i64: 128, 128>}, {pipeline_mode = #tpu.pipeline_mode<synchronous>, transform_indices = @transform_6, window_bounds = array<i64: 1, 128>}, {transform_indices = @transform_7, window_bounds = array<i64: 8, 128>}]} {
    %c0 = arith.constant 0 : index
    %c0_0 = arith.constant 0 : index
    %0 = vector.load %arg1[%c0, %c0_0] : memref<8x128xf32, #tpu.memory_space<vmem>>, vector<8x128xf32>
    %c0_1 = arith.constant 0 : index
    %c0_2 = arith.constant 0 : index
    %1 = vector.load %arg2[%c0_1, %c0_2] : memref<128x128xbf16, #tpu.memory_space<vmem>>, vector<128x128xbf16>
    %c0_3 = arith.constant 0 : index
    %c0_4 = arith.constant 0 : index
    %2 = vector.load %arg3[%c0_3, %c0_4] : memref<1x128xf32, #tpu.memory_space<vmem>>, vector<1x128xf32>
    %3 = arith.truncf %0 : vector<8x128xf32> to vector<8x128xbf16>
    %cst = arith.constant dense<0.000000e+00> : vector<8x128xf32>
    %4 = tpu.matmul %3, %1, %cst {dimension_numbers = #tpu.dot_dimension_numbers<[1], [0], [0], [1], [0, 0, 1, 1], [], []>} : vector<8x128xbf16>, vector<128x128xbf16>, vector<8x128xf32> -> vector<8x128xf32>
    %5 = vector.broadcast %2 : vector<1x128xf32> to vector<8x128xf32>
    %6 = arith.addf %4, %5 : vector<8x128xf32>
    %cst_5 = arith.constant 0.000000e+00 : f32
    %7 = vector.broadcast %cst_5 : f32 to vector<8x128xf32>
    %8 = arith.maximumf %6, %7 : vector<8x128xf32>
    %9 = arith.mulf %8, %8 : vector<8x128xf32>
    %c0_6 = arith.constant 0 : index
    %c0_7 = arith.constant 0 : index
    %10 = vector.load %arg4[%c0_6, %c0_7] : memref<128x128xbf16, #tpu.memory_space<vmem>>, vector<128x128xbf16>
    %c0_8 = arith.constant 0 : index
    %c0_9 = arith.constant 0 : index
    %11 = vector.load %arg5[%c0_8, %c0_9] : memref<1x128xf32, #tpu.memory_space<vmem>>, vector<1x128xf32>
    %12 = arith.truncf %9 : vector<8x128xf32> to vector<8x128xbf16>
    %cst_10 = arith.constant dense<0.000000e+00> : vector<8x128xf32>
    %13 = tpu.matmul %12, %10, %cst_10 {dimension_numbers = #tpu.dot_dimension_numbers<[1], [0], [0], [1], [0, 0, 1, 1], [], []>} : vector<8x128xbf16>, vector<128x128xbf16>, vector<8x128xf32> -> vector<8x128xf32>
    %14 = vector.broadcast %11 : vector<1x128xf32> to vector<8x128xf32>
    %15 = arith.addf %13, %14 : vector<8x128xf32>
    %cst_11 = arith.constant 0.000000e+00 : f32
    %16 = vector.broadcast %cst_11 : f32 to vector<8x128xf32>
    %17 = arith.maximumf %15, %16 : vector<8x128xf32>
    %18 = arith.mulf %17, %17 : vector<8x128xf32>
    %c0_12 = arith.constant 0 : index
    %c0_13 = arith.constant 0 : index
    %19 = vector.load %arg6[%c0_12, %c0_13] : memref<128x128xbf16, #tpu.memory_space<vmem>>, vector<128x128xbf16>
    %c0_14 = arith.constant 0 : index
    %c0_15 = arith.constant 0 : index
    %20 = vector.load %arg7[%c0_14, %c0_15] : memref<1x128xf32, #tpu.memory_space<vmem>>, vector<1x128xf32>
    %21 = arith.truncf %18 : vector<8x128xf32> to vector<8x128xbf16>
    %cst_16 = arith.constant dense<0.000000e+00> : vector<8x128xf32>
    %22 = tpu.matmul %21, %19, %cst_16 {dimension_numbers = #tpu.dot_dimension_numbers<[1], [0], [0], [1], [0, 0, 1, 1], [], []>} : vector<8x128xbf16>, vector<128x128xbf16>, vector<8x128xf32> -> vector<8x128xf32>
    %23 = vector.broadcast %20 : vector<1x128xf32> to vector<8x128xf32>
    %24 = arith.addf %22, %23 : vector<8x128xf32>
    %c0_17 = arith.constant 0 : index
    %c0_18 = arith.constant 0 : index
    %25 = vector.load %arg8[%c0_17, %c0_18] : memref<8x128xf32, #tpu.memory_space<vmem>>, vector<8x128xf32>
    tpu.vector_store %arg8[%c0_17, %c0_18], %24 {strides = array<i32>} : memref<8x128xf32, #tpu.memory_space<vmem>>, vector<8x128xf32>,
    return
  }
  func.func @transform_0(%arg0: i32) -> (i32, i32) {
    %c0_i32 = arith.constant 0 : i32
    %c0_i32_0 = arith.constant 0 : i32
    return %arg0, %c0_i32 : i32, i32
  }
  func.func @transform_1(%arg0: i32) -> (i32, i32) {
    %c0_i32 = arith.constant 0 : i32
    %c0_i32_0 = arith.constant 0 : i32
    %c0_i32_1 = arith.constant 0 : i32
    return %c0_i32, %c0_i32_0 : i32, i32
  }
  func.func @transform_2(%arg0: i32) -> (i32, i32) {
    %c0_i32 = arith.constant 0 : i32
    %c0_i32_0 = arith.constant 0 : i32
    %c0_i32_1 = arith.constant 0 : i32
    return %c0_i32, %c0_i32_0 : i32, i32
  }
  func.func @transform_3(%arg0: i32) -> (i32, i32) {
    %c0_i32 = arith.constant 0 : i32
    %c0_i32_0 = arith.constant 0 : i32
    %c0_i32_1 = arith.constant 0 : i32
    return %c0_i32, %c0_i32_0 : i32, i32
  }
  func.func @transform_4(%arg0: i32) -> (i32, i32) {
    %c0_i32 = arith.constant 0 : i32
    %c0_i32_0 = arith.constant 0 : i32
    %c0_i32_1 = arith.constant 0 : i32
    return %c0_i32, %c0_i32_0 : i32, i32
  }
  func.func @transform_5(%arg0: i32) -> (i32, i32) {
    %c0_i32 = arith.constant 0 : i32
    %c0_i32_0 = arith.constant 0 : i32
    %c0_i32_1 = arith.constant 0 : i32
    return %c0_i32, %c0_i32_0 : i32, i32
  }
  func.func @transform_6(%arg0: i32) -> (i32, i32) {
    %c0_i32 = arith.constant 0 : i32
    %c0_i32_0 = arith.constant 0 : i32
    %c0_i32_1 = arith.constant 0 : i32
    return %c0_i32, %c0_i32_0 : i32, i32
  }
  func.func @transform_7(%arg0: i32) -> (i32, i32) {
    %c0_i32 = arith.constant 0 : i32
    %c0_i32_0 = arith.constant 0 : i32
    return %arg0, %c0_i32 : i32, i32
  }
}

</mosaic_0001>

<llo_original>
// kernel: tpu_custom_call.1
$region0: #{tpu_custom_call.1}
  #allocation0 [shape = 'u32[]', space=smem, size = 0x4, offset = 0x4, fixed_abs, tag = 'smem constant byte address 0x4 - core index']
  #allocation1 [shape = 'u32[144,128]{1,0:T(1,128)}', space=vmem, size = 0x12000, scoped, tag = 'internal scratch']
  %s0 = inlined_call_operand.hbm [shape: f32[8,128], index: 0, kind: input, shape index: {}]
  %s1 = inlined_call_operand.hbm [shape: bf16[128,128], index: 1, kind: input, shape index: {}]
  %s2 = inlined_call_operand.vmem [shape: f32[1,128], index: 2, kind: input, shape index: {}]
  %s3 = inlined_call_operand.hbm [shape: bf16[128,128], index: 3, kind: input, shape index: {}]
  %s4 = inlined_call_operand.vmem [shape: f32[1,128], index: 4, kind: input, shape index: {}]
  %s5 = inlined_call_operand.hbm [shape: bf16[128,128], index: 5, kind: input, shape index: {}]
  %s6 = inlined_call_operand.vmem [shape: f32[1,128], index: 6, kind: input, shape index: {}]
  %s7 = inlined_call_operand.hbm [shape: f32[8,128], index: 7, kind: output, shape index: {}]
  %s8 = sld [smem:[#allocation0]]
  $region54: #{tpu_custom_call.1} parent=0
    _
  %s10 = ssub.s32 1, %s8
  %s11 = scalar_select 0, %s10, %s8
  $region1: #{tpu_custom_call.1} parent=0
    #allocation2 [shape = 'u8[4096]{0}', space=vmem, size = 0x1000, scoped, tag = 'input window, operand 0, single buffered']
    #allocation3 [shape = 's32[1]{0}', space=sflag, size = 0x4, scoped, tag = 'scoped memory for tpu_custom_call.1']
    #allocation4 [shape = 's32[1]{0}', space=sflag, size = 0x4, scoped, tag = 'scoped memory for tpu_custom_call.1']
    #allocation5 [shape = 'u8[32768]{0}', space=vmem, size = 0x8000, scoped, tag = 'input window, operand 1, single buffered']
    #allocation6 [shape = 's32[1]{0}', space=sflag, size = 0x4, scoped, tag = 'scoped memory for tpu_custom_call.1']
    #allocation7 [shape = 'u8[32768]{0}', space=vmem, size = 0x8000, scoped, tag = 'input window, operand 3, single buffered']
    #allocation8 [shape = 'u8[32768]{0}', space=vmem, size = 0x8000, scoped, tag = 'input window, operand 5, single buffered']
    #allocation9 [shape = 's32[1]{0}', space=sflag, size = 0x4, scoped, tag = 'scoped memory for tpu_custom_call.1']
    #allocation10 [shape = 'u8[4096]{0}', space=vmem, size = 0x1000, scoped, tag = 'output window, operand 0, single buffered']
    %12 = vsyncpa [#allocation3], 0
    %13 = vsyncpa [#allocation6], 0
    %14 = vsyncpa [#allocation9], 0
    %15 = vsyncpa [#allocation4], 0
    // Predicated region
    $region2: #{tpu_custom_call.1} parent=1 // pred_check
      _
    $region3: #{tpu_custom_call.1} parent=1 // pred_check_branch
      %17 = sbr.rel (0) target = $region5
    $region4: #{tpu_custom_call.1} parent=1 // pred_region
      %s19 = ssub.s32 128, 128
      %20 = vsyncadd [#allocation3], %s19
      %s22 = sshll.u32 [#allocation2], 4
      %s23 = int_to_ptr.vmem [resolvable:$true] %s22
      %25 = dma.hbm_to_vmem [thread:$0]  %s0, 128, %s23, [#allocation3]
    $region5: #{tpu_custom_call.1} parent=1 // pred_fallthru
      _
    // Predicated region
    $region6: #{tpu_custom_call.1} parent=1 // pred_check
      _
    $region7: #{tpu_custom_call.1} parent=1 // pred_check_branch
      %27 = sbr.rel (0) target = $region9
    $region8: #{tpu_custom_call.1} parent=1 // pred_region
      %s29 = ssub.s32 1024, 1024
      %30 = vsyncadd [#allocation6], %s29
      %s31 = sshll.u32 [#allocation5], 4
      %s32 = int_to_ptr.vmem [resolvable:$true] %s31
      %37 = dma.hbm_to_vmem [thread:$0]  %s1, 1024, %s32, [#allocation6], 64, 64, 4
    $region9: #{tpu_custom_call.1} parent=1 // pred_fallthru
      _
    // Predicated region
    $region10: #{tpu_custom_call.1} parent=1 // pred_check
      _
    $region11: #{tpu_custom_call.1} parent=1 // pred_check_branch
      %39 = sbr.rel (0) target = $region13
    $region12: #{tpu_custom_call.1} parent=1 // pred_region
      _
    $region13: #{tpu_custom_call.1} parent=1 // pred_fallthru
      _
    // Predicated region
    $region14: #{tpu_custom_call.1} parent=1 // pred_check
      _
    $region15: #{tpu_custom_call.1} parent=1 // pred_check_branch
      %41 = sbr.rel (0) target = $region17
    $region16: #{tpu_custom_call.1} parent=1 // pred_region
      %s43 = ssub.s32 1024, 1024
      %44 = vsyncadd [#allocation6], %s43
      %s45 = sshll.u32 [#allocation7], 4
      %s46 = int_to_ptr.vmem [resolvable:$true] %s45
      %51 = dma.hbm_to_vmem [thread:$0]  %s3, 1024, %s46, [#allocation6], 64, 64, 4
    $region17: #{tpu_custom_call.1} parent=1 // pred_fallthru
      _
    // Predicated region
    $region18: #{tpu_custom_call.1} parent=1 // pred_check
      _
    $region19: #{tpu_custom_call.1} parent=1 // pred_check_branch
      %53 = sbr.rel (0) target = $region21
    $region20: #{tpu_custom_call.1} parent=1 // pred_region
      _
    $region21: #{tpu_custom_call.1} parent=1 // pred_fallthru
      _
    // Predicated region
    $region22: #{tpu_custom_call.1} parent=1 // pred_check
      _
    $region23: #{tpu_custom_call.1} parent=1 // pred_check_branch
      %55 = sbr.rel (0) target = $region25
    $region24: #{tpu_custom_call.1} parent=1 // pred_region
      %s57 = ssub.s32 1024, 1024
      %58 = vsyncadd [#allocation9], %s57
      %s59 = sshll.u32 [#allocation8], 4
      %s60 = int_to_ptr.vmem [resolvable:$true] %s59
      %65 = dma.hbm_to_vmem [thread:$0]  %s5, 1024, %s60, [#allocation9], 64, 64, 4
    $region25: #{tpu_custom_call.1} parent=1 // pred_fallthru
      _
    // Predicated region
    $region26: #{tpu_custom_call.1} parent=1 // pred_check
      _
    $region27: #{tpu_custom_call.1} parent=1 // pred_check_branch
      %67 = sbr.rel (0) target = $region29
    $region28: #{tpu_custom_call.1} parent=1 // pred_region
      _
    $region29: #{tpu_custom_call.1} parent=1 // pred_fallthru
      _
    // Predicated region
    $region30: #{tpu_custom_call.1} parent=1 // pred_check
      _
    $region31: #{tpu_custom_call.1} parent=1 // pred_check_branch
      %69 = sbr.rel (0) target = $region33
    $region32: #{tpu_custom_call.1} parent=1 // pred_region
      %70 = dma.done [#allocation3], 128
    $region33: #{tpu_custom_call.1} parent=1 // pred_fallthru
      _
    // Predicated region
    $region34: #{tpu_custom_call.1} parent=1 // pred_check
      _
    $region35: #{tpu_custom_call.1} parent=1 // pred_check_branch
      %72 = sbr.rel (0) target = $region37
    $region36: #{tpu_custom_call.1} parent=1 // pred_region
      %73 = dma.done [#allocation6], 1024
    $region37: #{tpu_custom_call.1} parent=1 // pred_fallthru
      _
    // Predicated region
    $region38: #{tpu_custom_call.1} parent=1 // pred_check
      _
    $region39: #{tpu_custom_call.1} parent=1 // pred_check_branch
      %75 = sbr.rel (0) target = $region41
    $region40: #{tpu_custom_call.1} parent=1 // pred_region
      %76 = dma.done [#allocation6], 1024
    $region41: #{tpu_custom_call.1} parent=1 // pred_fallthru
      _
    // Predicated region
    $region42: #{tpu_custom_call.1} parent=1 // pred_check
      _
    $region43: #{tpu_custom_call.1} parent=1 // pred_check_branch
      %78 = sbr.rel (0) target = $region45
    $region44: #{tpu_custom_call.1} parent=1 // pred_region
      %79 = dma.done [#allocation9], 1024
    $region45: #{tpu_custom_call.1} parent=1 // pred_fallthru
      _
    %v81 = vld [vmem:[#allocation2] sm:$0xff]
    %v82 = vld [vmem:[#allocation5] sm:$0xf]
    %v83 = vld [vmem:[#allocation5 + $0x4] sm:$0xf]
    %v84 = vld [vmem:[#allocation5 + $0x8] sm:$0xf]
    %v85 = vld [vmem:[#allocation5 + $0xc] sm:$0xf]
    %v86 = vld [vmem:[#allocation5 + $0x10] sm:$0xf]
    %v87 = vld [vmem:[#allocation5 + $0x14] sm:$0xf]
    %v88 = vld [vmem:[#allocation5 + $0x18] sm:$0xf]
    %v89 = vld [vmem:[#allocation5 + $0x1c] sm:$0xf]
    %v90 = vld [vmem:[#allocation5 + $0x20] sm:$0xf]
    %v91 = vld [vmem:[#allocation5 + $0x24] sm:$0xf]
    %v92 = vld [vmem:[#allocation5 + $0x28] sm:$0xf]
    %v93 = vld [vmem:[#allocation5 + $0x2c] sm:$0xf]
    %v94 = vld [vmem:[#allocation5 + $0x30] sm:$0xf]
    %v95 = vld [vmem:[#allocation5 + $0x34] sm:$0xf]
    %v96 = vld [vmem:[#allocation5 + $0x38] sm:$0xf]
    %v97 = vld [vmem:[#allocation5 + $0x3c] sm:$0xf]
    %v98 = vld [vmem:[%s2] sm:$0x1]
    %v99 = vpack.c.bf16 %v81, %v81
    %v101 = vlaneseq
    %v102 = vshrl.u32 %v101, 7
    %v103 = vsub.s32 0, %v102
    %v104 = vrot.slane %v98, %v103
    %v122 = vunpack.c.l.b16 %v82
    %v123 = vunpack.c.l.b16 %v83
    %v124 = vunpack.c.l.b16 %v84
    %v125 = vunpack.c.l.b16 %v85
    %v126 = vunpack.c.l.b16 %v86
    %v127 = vunpack.c.l.b16 %v87
    %v128 = vunpack.c.l.b16 %v88
    %v129 = vunpack.c.l.b16 %v89
    %v130 = vunpack.c.l.b16 %v90
    %v131 = vunpack.c.l.b16 %v91
    %v132 = vunpack.c.l.b16 %v92
    %v133 = vunpack.c.l.b16 %v93
    %v134 = vunpack.c.l.b16 %v94
    %v135 = vunpack.c.l.b16 %v95
    %v136 = vunpack.c.l.b16 %v96
    %v137 = vunpack.c.l.b16 %v97
    %v138 = vpack.c.b16 %v123, %v122
    %v139 = vpack.c.b16 %v125, %v124
    %v140 = vpack.c.b16 %v127, %v126
    %v141 = vpack.c.b16 %v129, %v128
    %v142 = vpack.c.b16 %v131, %v130
    %v143 = vpack.c.b16 %v133, %v132
    %v144 = vpack.c.b16 %v135, %v134
    %v145 = vpack.c.b16 %v137, %v136
    %154 = vmatprep.subr.bf16.mxu0 0
    %155 = vmatpush1.bf16.msra.mxu0 %v145
    %156 = vmatprep.subr.bf16.mxu0 0
    %157 = vmatpush1.bf16.msra.mxu0 %v144
    %158 = vmatprep.subr.bf16.mxu0 0
    %159 = vmatpush1.bf16.msra.mxu0 %v143
    %160 = vmatprep.subr.bf16.mxu0 0
    %161 = vmatpush1.bf16.msra.mxu0 %v142
    %162 = vmatprep.subr.bf16.mxu0 0
    %163 = vmatpush1.bf16.msra.mxu0 %v141
    %164 = vmatprep.subr.bf16.mxu0 0
    %165 = vmatpush1.bf16.msra.mxu0 %v140
    %166 = vmatprep.subr.bf16.mxu0 0
    %167 = vmatpush1.bf16.msra.mxu0 %v139
    %168 = vmatprep.subr.bf16.mxu0 0
    %169 = vmatpush1.bf16.msra.mxu0 %v138
    %170 = vmatprep.subr.bf16.mxu0 0
    %171 = vmatpush2.bf16.msra.mxu0 0
    %172 = vmatprep.subr.bf16.mxu0 0
    %173 = vmatpush2.bf16.msra.mxu0 0
    %174 = vmatprep.subr.bf16.mxu0 0
    %175 = vmatpush2.bf16.msra.mxu0 0
    %176 = vmatprep.subr.bf16.mxu0 0
    %177 = vmatpush2.bf16.msra.mxu0 0
    %178 = vmatprep.subr.bf16.mxu0 0
    %179 = vmatpush2.bf16.msra.mxu0 0
    %180 = vmatprep.subr.bf16.mxu0 0
    %181 = vmatpush2.bf16.msra.mxu0 0
    %182 = vmatprep.subr.bf16.mxu0 0
    %183 = vmatpush2.bf16.msra.mxu0 0
    %184 = vmatprep.subr.bf16.mxu0 0
    %185 = vmatpush2.bf16.msra.mxu0 0
    %186 = vmatprep.mubr.bf16.mxu0 0
    %187 = vmatmul.mubr.bf16.gmra.mxu0 %v99
    %v188 = vpop.f32.mrf.mxu0
    %v189 = vadd.f32 %v104, %v188
    %v190 = vpop.f32.mrf.mxu0
    %v191 = vpop.f32.mrf.mxu0
    %v192 = vpop.f32.mrf.mxu0
    %193 = vdwg.mxu0
    %v194 = vmax.f32 %v189, 0.0
    %v195 = vmul.f32 %v194, %v194
    %v196 = vld [vmem:[#allocation7] sm:$0xf]
    %v197 = vld [vmem:[#allocation7 + $0x4] sm:$0xf]
    %v198 = vld [vmem:[#allocation7 + $0x8] sm:$0xf]
    %v199 = vld [vmem:[#allocation7 + $0xc] sm:$0xf]
    %v200 = vld [vmem:[#allocation7 + $0x10] sm:$0xf]
    %v201 = vld [vmem:[#allocation7 + $0x14] sm:$0xf]
    %v202 = vld [vmem:[#allocation7 + $0x18] sm:$0xf]
    %v203 = vld [vmem:[#allocation7 + $0x1c] sm:$0xf]
    %v204 = vld [vmem:[#allocation7 + $0x20] sm:$0xf]
    %v205 = vld [vmem:[#allocation7 + $0x24] sm:$0xf]
    %v206 = vld [vmem:[#allocation7 + $0x28] sm:$0xf]
    %v207 = vld [vmem:[#allocation7 + $0x2c] sm:$0xf]
    %v208 = vld [vmem:[#allocation7 + $0x30] sm:$0xf]
    %v209 = vld [vmem:[#allocation7 + $0x34] sm:$0xf]
    %v210 = vld [vmem:[#allocation7 + $0x38] sm:$0xf]
    %v211 = vld [vmem:[#allocation7 + $0x3c] sm:$0xf]
    %v212 = vld [vmem:[%s4] sm:$0x1]
    %v213 = vpack.c.bf16 %v195, %v195
    %v215 = vlaneseq
    %v216 = vshrl.u32 %v215, 7
    %v217 = vsub.s32 0, %v216
    %v218 = vrot.slane %v212, %v217
    %v236 = vunpack.c.l.b16 %v196
    %v237 = vunpack.c.l.b16 %v197
    %v238 = vunpack.c.l.b16 %v198
    %v239 = vunpack.c.l.b16 %v199
    %v240 = vunpack.c.l.b16 %v200
    %v241 = vunpack.c.l.b16 %v201
    %v242 = vunpack.c.l.b16 %v202
    %v243 = vunpack.c.l.b16 %v203
    %v244 = vunpack.c.l.b16 %v204
    %v245 = vunpack.c.l.b16 %v205
    %v246 = vunpack.c.l.b16 %v206
    %v247 = vunpack.c.l.b16 %v207
    %v248 = vunpack.c.l.b16 %v208
    %v249 = vunpack.c.l.b16 %v209
    %v250 = vunpack.c.l.b16 %v210
    %v251 = vunpack.c.l.b16 %v211
    %v252 = vpack.c.b16 %v237, %v236
    %v253 = vpack.c.b16 %v239, %v238
    %v254 = vpack.c.b16 %v241, %v240
    %v255 = vpack.c.b16 %v243, %v242
    %v256 = vpack.c.b16 %v245, %v244
    %v257 = vpack.c.b16 %v247, %v246
    %v258 = vpack.c.b16 %v249, %v248
    %v259 = vpack.c.b16 %v251, %v250
    %268 = vmatprep.subr.bf16.mxu0 0
    %269 = vmatpush1.bf16.msra.mxu0 %v259
    %270 = vmatprep.subr.bf16.mxu0 0
    %271 = vmatpush1.bf16.msra.mxu0 %v258
    %272 = vmatprep.subr.bf16.mxu0 0
    %273 = vmatpush1.bf16.msra.mxu0 %v257
    %274 = vmatprep.subr.bf16.mxu0 0
    %275 = vmatpush1.bf16.msra.mxu0 %v256
    %276 = vmatprep.subr.bf16.mxu0 0
    %277 = vmatpush1.bf16.msra.mxu0 %v255
    %278 = vmatprep.subr.bf16.mxu0 0
    %279 = vmatpush1.bf16.msra.mxu0 %v254
    %280 = vmatprep.subr.bf16.mxu0 0
    %281 = vmatpush1.bf16.msra.mxu0 %v253
    %282 = vmatprep.subr.bf16.mxu0 0
    %283 = vmatpush1.bf16.msra.mxu0 %v252
    %284 = vmatprep.subr.bf16.mxu0 0
    %285 = vmatpush2.bf16.msra.mxu0 0
    %286 = vmatprep.subr.bf16.mxu0 0
    %287 = vmatpush2.bf16.msra.mxu0 0
    %288 = vmatprep.subr.bf16.mxu0 0
    %289 = vmatpush2.bf16.msra.mxu0 0
    %290 = vmatprep.subr.bf16.mxu0 0
    %291 = vmatpush2.bf16.msra.mxu0 0
    %292 = vmatprep.subr.bf16.mxu0 0
    %293 = vmatpush2.bf16.msra.mxu0 0
    %294 = vmatprep.subr.bf16.mxu0 0
    %295 = vmatpush2.bf16.msra.mxu0 0
    %296 = vmatprep.subr.bf16.mxu0 0
    %297 = vmatpush2.bf16.msra.mxu0 0
    %298 = vmatprep.subr.bf16.mxu0 0
    %299 = vmatpush2.bf16.msra.mxu0 0
    %300 = vmatprep.mubr.bf16.mxu0 0
    %301 = vmatmul.mubr.bf16.gmra.mxu0 %v213
    %v302 = vpop.f32.mrf.mxu0
    %v303 = vadd.f32 %v218, %v302
    %v304 = vpop.f32.mrf.mxu0
    %v305 = vpop.f32.mrf.mxu0
    %v306 = vpop.f32.mrf.mxu0
    %307 = vdwg.mxu0
    %v308 = vmax.f32 %v303, 0.0
    %v309 = vmul.f32 %v308, %v308
    %v310 = vld [vmem:[#allocation8] sm:$0xf]
    %v311 = vld [vmem:[#allocation8 + $0x4] sm:$0xf]
    %v312 = vld [vmem:[#allocation8 + $0x8] sm:$0xf]
    %v313 = vld [vmem:[#allocation8 + $0xc] sm:$0xf]
    %v314 = vld [vmem:[#allocation8 + $0x10] sm:$0xf]
    %v315 = vld [vmem:[#allocation8 + $0x14] sm:$0xf]
    %v316 = vld [vmem:[#allocation8 + $0x18] sm:$0xf]
    %v317 = vld [vmem:[#allocation8 + $0x1c] sm:$0xf]
    %v318 = vld [vmem:[#allocation8 + $0x20] sm:$0xf]
    %v319 = vld [vmem:[#allocation8 + $0x24] sm:$0xf]
    %v320 = vld [vmem:[#allocation8 + $0x28] sm:$0xf]
    %v321 = vld [vmem:[#allocation8 + $0x2c] sm:$0xf]
    %v322 = vld [vmem:[#allocation8 + $0x30] sm:$0xf]
    %v323 = vld [vmem:[#allocation8 + $0x34] sm:$0xf]
    %v324 = vld [vmem:[#allocation8 + $0x38] sm:$0xf]
    %v325 = vld [vmem:[#allocation8 + $0x3c] sm:$0xf]
    %v326 = vld [vmem:[%s6] sm:$0x1]
    %v327 = vpack.c.bf16 %v309, %v309
    %v329 = vlaneseq
    %v330 = vshrl.u32 %v329, 7
    %v331 = vsub.s32 0, %v330
    %v332 = vrot.slane %v326, %v331
    %v350 = vunpack.c.l.b16 %v310
    %v351 = vunpack.c.l.b16 %v311
    %v352 = vunpack.c.l.b16 %v312
    %v353 = vunpack.c.l.b16 %v313
    %v354 = vunpack.c.l.b16 %v314
    %v355 = vunpack.c.l.b16 %v315
    %v356 = vunpack.c.l.b16 %v316
    %v357 = vunpack.c.l.b16 %v317
    %v358 = vunpack.c.l.b16 %v318
    %v359 = vunpack.c.l.b16 %v319
    %v360 = vunpack.c.l.b16 %v320
    %v361 = vunpack.c.l.b16 %v321
    %v362 = vunpack.c.l.b16 %v322
    %v363 = vunpack.c.l.b16 %v323
    %v364 = vunpack.c.l.b16 %v324
    %v365 = vunpack.c.l.b16 %v325
    %v366 = vpack.c.b16 %v351, %v350
    %v367 = vpack.c.b16 %v353, %v352
    %v368 = vpack.c.b16 %v355, %v354
    %v369 = vpack.c.b16 %v357, %v356
    %v370 = vpack.c.b16 %v359, %v358
    %v371 = vpack.c.b16 %v361, %v360
    %v372 = vpack.c.b16 %v363, %v362
    %v373 = vpack.c.b16 %v365, %v364
    %382 = vmatprep.subr.bf16.mxu0 0
    %383 = vmatpush1.bf16.msra.mxu0 %v373
    %384 = vmatprep.subr.bf16.mxu0 0
    %385 = vmatpush1.bf16.msra.mxu0 %v372
    %386 = vmatprep.subr.bf16.mxu0 0
    %387 = vmatpush1.bf16.msra.mxu0 %v371
    %388 = vmatprep.subr.bf16.mxu0 0
    %389 = vmatpush1.bf16.msra.mxu0 %v370
    %390 = vmatprep.subr.bf16.mxu0 0
    %391 = vmatpush1.bf16.msra.mxu0 %v369
    %392 = vmatprep.subr.bf16.mxu0 0
    %393 = vmatpush1.bf16.msra.mxu0 %v368
    %394 = vmatprep.subr.bf16.mxu0 0
    %395 = vmatpush1.bf16.msra.mxu0 %v367
    %396 = vmatprep.subr.bf16.mxu0 0
    %397 = vmatpush1.bf16.msra.mxu0 %v366
    %398 = vmatprep.subr.bf16.mxu0 0
    %399 = vmatpush2.bf16.msra.mxu0 0
    %400 = vmatprep.subr.bf16.mxu0 0
    %401 = vmatpush2.bf16.msra.mxu0 0
    %402 = vmatprep.subr.bf16.mxu0 0
    %403 = vmatpush2.bf16.msra.mxu0 0
    %404 = vmatprep.subr.bf16.mxu0 0
    %405 = vmatpush2.bf16.msra.mxu0 0
    %406 = vmatprep.subr.bf16.mxu0 0
    %407 = vmatpush2.bf16.msra.mxu0 0
    %408 = vmatprep.subr.bf16.mxu0 0
    %409 = vmatpush2.bf16.msra.mxu0 0
    %410 = vmatprep.subr.bf16.mxu0 0
    %411 = vmatpush2.bf16.msra.mxu0 0
    %412 = vmatprep.subr.bf16.mxu0 0
    %413 = vmatpush2.bf16.msra.mxu0 0
    %414 = vmatprep.mubr.bf16.mxu0 0
    %415 = vmatmul.mubr.bf16.gmra.mxu0 %v327
    %v416 = vpop.f32.mrf.mxu0
    %v417 = vadd.f32 %v332, %v416
    %v418 = vpop.f32.mrf.mxu0
    %v419 = vpop.f32.mrf.mxu0
    %v420 = vpop.f32.mrf.mxu0
    %421 = vdwg.mxu0
    %422 = vst [vmem:[#allocation10] sm:$0xff] %v417
    // Predicated region
    $region46: #{tpu_custom_call.1} parent=1 // pred_check
      _
    $region47: #{tpu_custom_call.1} parent=1 // pred_check_branch
      %424 = sbr.rel (0) target = $region49
    $region48: #{tpu_custom_call.1} parent=1 // pred_region
      %s426 = ssub.s32 128, 128
      %427 = vsyncadd [#allocation4], %s426
      %s429 = sshll.u32 [#allocation10], 4
      %s430 = int_to_ptr.vmem [resolvable:$true] %s429
      %432 = dma.vmem_to_hbm [thread:$0]  %s430, 128, %s7, [#allocation4]
    $region49: #{tpu_custom_call.1} parent=1 // pred_fallthru
      _
    // Predicated region
    $region50: #{tpu_custom_call.1} parent=1 // pred_check
      _
    $region51: #{tpu_custom_call.1} parent=1 // pred_check_branch
      %434 = sbr.rel (0) target = $region53
    $region52: #{tpu_custom_call.1} parent=1 // pred_region
      %435 = dma.done [#allocation4], 128
    $region53: #{tpu_custom_call.1} parent=1 // pred_fallthru
      _
    %436 = vsyncpa [#allocation3], 1
    %437 = vsyncpa [#allocation6], 1
    %438 = vsyncpa [#allocation9], 1
    %439 = vsyncpa [#allocation4], 1

// kernel: tpu_custom_call.1
$region0: #{tpu_custom_call.1}
  #allocation0 [shape = 'u32[]', space=smem, size = 0x4, offset = 0x4, fixed_abs, tag = 'smem constant byte address 0x4 - core index']
  #allocation1 [shape = 'u32[144,128]{1,0:T(1,128)}', space=vmem, size = 0x12000, scoped, tag = 'internal scratch']
  %s0 = inlined_call_operand.hbm [shape: f32[8,128], index: 0, kind: input, shape index: {}]
  %s1 = inlined_call_operand.hbm [shape: bf16[128,128], index: 1, kind: input, shape index: {}]
  %s2 = inlined_call_operand.vmem [shape: f32[1,128], index: 2, kind: input, shape index: {}]
  %s3 = inlined_call_operand.hbm [shape: bf16[128,128], index: 3, kind: input, shape index: {}]
  %s4 = inlined_call_operand.vmem [shape: f32[1,128], index: 4, kind: input, shape index: {}]
  %s5 = inlined_call_operand.hbm [shape: bf16[128,128], index: 5, kind: input, shape index: {}]
  %s6 = inlined_call_operand.vmem [shape: f32[1,128], index: 6, kind: input, shape index: {}]
  %s7 = inlined_call_operand.hbm [shape: f32[8,128], index: 7, kind: output, shape index: {}]
  %s8 = sld [smem:[#allocation0]]
  $region54: #{tpu_custom_call.1} parent=0
    _
  %s10 = ssub.s32 1, %s8
  %s11 = scalar_select 0, %s10, %s8
  $region1: #{tpu_custom_call.1} parent=0
    #allocation2 [shape = 'u8[4096]{0}', space=vmem, size = 0x1000, scoped, tag = 'input window, operand 0, single buffered']
    #allocation3 [shape = 's32[1]{0}', space=sflag, size = 0x4, scoped, tag = 'scoped memory for tpu_custom_call.1']
    #allocation4 [shape = 's32[1]{0}', space=sflag, size = 0x4, scoped, tag = 'scoped memory for tpu_custom_call.1']
    #allocation5 [shape = 'u8[32768]{0}', space=vmem, size = 0x8000, scoped, tag = 'input window, operand 1, single buffered']
    #allocation6 [shape = 's32[1]{0}', space=sflag, size = 0x4, scoped, tag = 'scoped memory for tpu_custom_call.1']
    #allocation7 [shape = 'u8[32768]{0}', space=vmem, size = 0x8000, scoped, tag = 'input window, operand 3, single buffered']
    #allocation8 [shape = 'u8[32768]{0}', space=vmem, size = 0x8000, scoped, tag = 'input window, operand 5, single buffered']
    #allocation9 [shape = 's32[1]{0}', space=sflag, size = 0x4, scoped, tag = 'scoped memory for tpu_custom_call.1']
    #allocation10 [shape = 'u8[4096]{0}', space=vmem, size = 0x1000, scoped, tag = 'output window, operand 0, single buffered']
    %12 = vsyncpa [#allocation3], 0
    %13 = vsyncpa [#allocation6], 0
    %14 = vsyncpa [#allocation9], 0
    %15 = vsyncpa [#allocation4], 0
    // Predicated region
    $region2: #{tpu_custom_call.1} parent=1 // pred_check
      _
    $region3: #{tpu_custom_call.1} parent=1 // pred_check_branch
      %17 = sbr.rel (0) target = $region5
    $region4: #{tpu_custom_call.1} parent=1 // pred_region
      %s19 = ssub.s32 128, 128
      %20 = vsyncadd [#allocation3], %s19
      %s22 = sshll.u32 [#allocation2], 4
      %s23 = int_to_ptr.vmem [resolvable:$true] %s22
      %25 = dma.hbm_to_vmem [thread:$0]  %s0, 128, %s23, [#allocation3]
    $region5: #{tpu_custom_call.1} parent=1 // pred_fallthru
      _
    // Predicated region
    $region6: #{tpu_custom_call.1} parent=1 // pred_check
      _
    $region7: #{tpu_custom_call.1} parent=1 // pred_check_branch
      %27 = sbr.rel (0) target = $region9
    $region8: #{tpu_custom_call.1} parent=1 // pred_region
      %s29 = ssub.s32 1024, 1024
      %30 = vsyncadd [#allocation6], %s29
      %s31 = sshll.u32 [#allocation5], 4
      %s32 = int_to_ptr.vmem [resolvable:$true] %s31
      %37 = dma.hbm_to_vmem [thread:$0]  %s1, 1024, %s32, [#allocation6], 64, 64, 4
    $region9: #{tpu_custom_call.1} parent=1 // pred_fallthru
      _
    // Predicated region
    $region10: #{tpu_custom_call.1} parent=1 // pred_check
      _
    $region11: #{tpu_custom_call.1} parent=1 // pred_check_branch
      %39 = sbr.rel (0) target = $region13
    $region12: #{tpu_custom_call.1} parent=1 // pred_region
      _
    $region13: #{tpu_custom_call.1} parent=1 // pred_fallthru
      _
    // Predicated region
    $region14: #{tpu_custom_call.1} parent=1 // pred_check
      _
    $region15: #{tpu_custom_call.1} parent=1 // pred_check_branch
      %41 = sbr.rel (0) target = $region17
    $region16: #{tpu_custom_call.1} parent=1 // pred_region
      %s43 = ssub.s32 1024, 1024
      %44 = vsyncadd [#allocation6], %s43
      %s45 = sshll.u32 [#allocation7], 4
      %s46 = int_to_ptr.vmem [resolvable:$true] %s45
      %51 = dma.hbm_to_vmem [thread:$0]  %s3, 1024, %s46, [#allocation6], 64, 64, 4
    $region17: #{tpu_custom_call.1} parent=1 // pred_fallthru
      _
    // Predicated region
    $region18: #{tpu_custom_call.1} parent=1 // pred_check
      _
    $region19: #{tpu_custom_call.1} parent=1 // pred_check_branch
      %53 = sbr.rel (0) target = $region21
    $region20: #{tpu_custom_call.1} parent=1 // pred_region
      _
    $region21: #{tpu_custom_call.1} parent=1 // pred_fallthru
      _
    // Predicated region
    $region22: #{tpu_custom_call.1} parent=1 // pred_check
      _
    $region23: #{tpu_custom_call.1} parent=1 // pred_check_branch
      %55 = sbr.rel (0) target = $region25
    $region24: #{tpu_custom_call.1} parent=1 // pred_region
      %s57 = ssub.s32 1024, 1024
      %58 = vsyncadd [#allocation9], %s57
      %s59 = sshll.u32 [#allocation8], 4
      %s60 = int_to_ptr.vmem [resolvable:$true] %s59
      %65 = dma.hbm_to_vmem [thread:$0]  %s5, 1024, %s60, [#allocation9], 64, 64, 4
    $region25: #{tpu_custom_call.1} parent=1 // pred_fallthru
      _
    // Predicated region
    $region26: #{tpu_custom_call.1} parent=1 // pred_check
      _
    $region27: #{tpu_custom_call.1} parent=1 // pred_check_branch
      %67 = sbr.rel (0) target = $region29
    $region28: #{tpu_custom_call.1} parent=1 // pred_region
      _
    $region29: #{tpu_custom_call.1} parent=1 // pred_fallthru
      _
    // Predicated region
    $region30: #{tpu_custom_call.1} parent=1 // pred_check
      _
    $region31: #{tpu_custom_call.1} parent=1 // pred_check_branch
      %69 = sbr.rel (0) target = $region33
    $region32: #{tpu_custom_call.1} parent=1 // pred_region
      %70 = dma.done [#allocation3], 128
    $region33: #{tpu_custom_call.1} parent=1 // pred_fallthru
      _
    // Predicated region
    $region34: #{tpu_custom_call.1} parent=1 // pred_check
      _
    $region35: #{tpu_custom_call.1} parent=1 // pred_check_branch
      %72 = sbr.rel (0) target = $region37
    $region36: #{tpu_custom_call.1} parent=1 // pred_region
      %73 = dma.done [#allocation6], 1024
    $region37: #{tpu_custom_call.1} parent=1 // pred_fallthru
      _
    // Predicated region
    $region38: #{tpu_custom_call.1} parent=1 // pred_check
      _
    $region39: #{tpu_custom_call.1} parent=1 // pred_check_branch
      %75 = sbr.rel (0) target = $region41
    $region40: #{tpu_custom_call.1} parent=1 // pred_region
      %76 = dma.done [#allocation6], 1024
    $region41: #{tpu_custom_call.1} parent=1 // pred_fallthru
      _
    // Predicated region
    $region42: #{tpu_custom_call.1} parent=1 // pred_check
      _
    $region43: #{tpu_custom_call.1} parent=1 // pred_check_branch
      %78 = sbr.rel (0) target = $region45
    $region44: #{tpu_custom_call.1} parent=1 // pred_region
      %79 = dma.done [#allocation9], 1024
    $region45: #{tpu_custom_call.1} parent=1 // pred_fallthru
      _
    %v81 = vld [vmem:[#allocation2] sm:$0xff]
    %v82 = vld [vmem:[#allocation5] sm:$0xf]
    %v83 = vld [vmem:[#allocation5 + $0x4] sm:$0xf]
    %v84 = vld [vmem:[#allocation5 + $0x8] sm:$0xf]
    %v85 = vld [vmem:[#allocation5 + $0xc] sm:$0xf]
    %v86 = vld [vmem:[#allocation5 + $0x10] sm:$0xf]
    %v87 = vld [vmem:[#allocation5 + $0x14] sm:$0xf]
    %v88 = vld [vmem:[#allocation5 + $0x18] sm:$0xf]
    %v89 = vld [vmem:[#allocation5 + $0x1c] sm:$0xf]
    %v90 = vld [vmem:[#allocation5 + $0x20] sm:$0xf]
    %v91 = vld [vmem:[#allocation5 + $0x24] sm:$0xf]
    %v92 = vld [vmem:[#allocation5 + $0x28] sm:$0xf]
    %v93 = vld [vmem:[#allocation5 + $0x2c] sm:$0xf]
    %v94 = vld [vmem:[#allocation5 + $0x30] sm:$0xf]
    %v95 = vld [vmem:[#allocation5 + $0x34] sm:$0xf]
    %v96 = vld [vmem:[#allocation5 + $0x38] sm:$0xf]
    %v97 = vld [vmem:[#allocation5 + $0x3c] sm:$0xf]
    %v98 = vld [vmem:[%s2] sm:$0x1]
    %v99 = vpack.c.bf16 %v81, %v81
    %v101 = vlaneseq
    %v102 = vshrl.u32 %v101, 7
    %v103 = vsub.s32 0, %v102
    %v104 = vrot.slane %v98, %v103
    %v122 = vunpack.c.l.b16 %v82
    %v123 = vunpack.c.l.b16 %v83
    %v124 = vunpack.c.l.b16 %v84
    %v125 = vunpack.c.l.b16 %v85
    %v126 = vunpack.c.l.b16 %v86
    %v127 = vunpack.c.l.b16 %v87
    %v128 = vunpack.c.l.b16 %v88
    %v129 = vunpack.c.l.b16 %v89
    %v130 = vunpack.c.l.b16 %v90
    %v131 = vunpack.c.l.b16 %v91
    %v132 = vunpack.c.l.b16 %v92
    %v133 = vunpack.c.l.b16 %v93
    %v134 = vunpack.c.l.b16 %v94
    %v135 = vunpack.c.l.b16 %v95
    %v136 = vunpack.c.l.b16 %v96
    %v137 = vunpack.c.l.b16 %v97
    %v138 = vpack.c.b16 %v123, %v122
    %v139 = vpack.c.b16 %v125, %v124
    %v140 = vpack.c.b16 %v127, %v126
    %v141 = vpack.c.b16 %v129, %v128
    %v142 = vpack.c.b16 %v131, %v130
    %v143 = vpack.c.b16 %v133, %v132
    %v144 = vpack.c.b16 %v135, %v134
    %v145 = vpack.c.b16 %v137, %v136
    %154 = vmatprep.subr.bf16.mxu0 0
    %155 = vmatpush1.bf16.msra.mxu0 %v145
    %156 = vmatprep.subr.bf16.mxu0 0
    %157 = vmatpush1.bf16.msra.mxu0 %v144
    %158 = vmatprep.subr.bf16.mxu0 0
    %159 = vmatpush1.bf16.msra.mxu0 %v143
    %160 = vmatprep.subr.bf16.mxu0 0
    %161 = vmatpush1.bf16.msra.mxu0 %v142
    %162 = vmatprep.subr.bf16.mxu0 0
    %163 = vmatpush1.bf16.msra.mxu0 %v141
    %164 = vmatprep.subr.bf16.mxu0 0
    %165 = vmatpush1.bf16.msra.mxu0 %v140
    %166 = vmatprep.subr.bf16.mxu0 0
    %167 = vmatpush1.bf16.msra.mxu0 %v139
    %168 = vmatprep.subr.bf16.mxu0 0
    %169 = vmatpush1.bf16.msra.mxu0 %v138
    %170 = vmatprep.subr.bf16.mxu0 0
    %171 = vmatpush2.bf16.msra.mxu0 0
    %172 = vmatprep.subr.bf16.mxu0 0
    %173 = vmatpush2.bf16.msra.mxu0 0
    %174 = vmatprep.subr.bf16.mxu0 0
    %175 = vmatpush2.bf16.msra.mxu0 0
    %176 = vmatprep.subr.bf16.mxu0 0
    %177 = vmatpush2.bf16.msra.mxu0 0
    %178 = vmatprep.subr.bf16.mxu0 0
    %179 = vmatpush2.bf16.msra.mxu0 0
    %180 = vmatprep.subr.bf16.mxu0 0
    %181 = vmatpush2.bf16.msra.mxu0 0
    %182 = vmatprep.subr.bf16.mxu0 0
    %183 = vmatpush2.bf16.msra.mxu0 0
    %184 = vmatprep.subr.bf16.mxu0 0
    %185 = vmatpush2.bf16.msra.mxu0 0
    %186 = vmatprep.mubr.bf16.mxu0 0
    %187 = vmatmul.mubr.bf16.gmra.mxu0 %v99
    %v188 = vpop.f32.mrf.mxu0
    %v189 = vadd.f32 %v104, %v188
    %v190 = vpop.f32.mrf.mxu0
    %v191 = vpop.f32.mrf.mxu0
    %v192 = vpop.f32.mrf.mxu0
    %193 = vdwg.mxu0
    %v194 = vmax.f32 %v189, 0.0
    %v195 = vmul.f32 %v194, %v194
    %v196 = vld [vmem:[#allocation7] sm:$0xf]
    %v197 = vld [vmem:[#allocation7 + $0x4] sm:$0xf]
    %v198 = vld [vmem:[#allocation7 + $0x8] sm:$0xf]
    %v199 = vld [vmem:[#allocation7 + $0xc] sm:$0xf]
    %v200 = vld [vmem:[#allocation7 + $0x10] sm:$0xf]
    %v201 = vld [vmem:[#allocation7 + $0x14] sm:$0xf]
    %v202 = vld [vmem:[#allocation7 + $0x18] sm:$0xf]
    %v203 = vld [vmem:[#allocation7 + $0x1c] sm:$0xf]
    %v204 = vld [vmem:[#allocation7 + $0x20] sm:$0xf]
    %v205 = vld [vmem:[#allocation7 + $0x24] sm:$0xf]
    %v206 = vld [vmem:[#allocation7 + $0x28] sm:$0xf]
    %v207 = vld [vmem:[#allocation7 + $0x2c] sm:$0xf]
    %v208 = vld [vmem:[#allocation7 + $0x30] sm:$0xf]
    %v209 = vld [vmem:[#allocation7 + $0x34] sm:$0xf]
    %v210 = vld [vmem:[#allocation7 + $0x38] sm:$0xf]
    %v211 = vld [vmem:[#allocation7 + $0x3c] sm:$0xf]
    %v212 = vld [vmem:[%s4] sm:$0x1]
    %v213 = vpack.c.bf16 %v195, %v195
    %v215 = vlaneseq
    %v216 = vshrl.u32 %v215, 7
    %v217 = vsub.s32 0, %v216
    %v218 = vrot.slane %v212, %v217
    %v236 = vunpack.c.l.b16 %v196
    %v237 = vunpack.c.l.b16 %v197
    %v238 = vunpack.c.l.b16 %v198
    %v239 = vunpack.c.l.b16 %v199
    %v240 = vunpack.c.l.b16 %v200
    %v241 = vunpack.c.l.b16 %v201
    %v242 = vunpack.c.l.b16 %v202
    %v243 = vunpack.c.l.b16 %v203
    %v244 = vunpack.c.l.b16 %v204
    %v245 = vunpack.c.l.b16 %v205
    %v246 = vunpack.c.l.b16 %v206
    %v247 = vunpack.c.l.b16 %v207
    %v248 = vunpack.c.l.b16 %v208
    %v249 = vunpack.c.l.b16 %v209
    %v250 = vunpack.c.l.b16 %v210
    %v251 = vunpack.c.l.b16 %v211
    %v252 = vpack.c.b16 %v237, %v236
    %v253 = vpack.c.b16 %v239, %v238
    %v254 = vpack.c.b16 %v241, %v240
    %v255 = vpack.c.b16 %v243, %v242
    %v256 = vpack.c.b16 %v245, %v244
    %v257 = vpack.c.b16 %v247, %v246
    %v258 = vpack.c.b16 %v249, %v248
    %v259 = vpack.c.b16 %v251, %v250
    %268 = vmatprep.subr.bf16.mxu0 0
    %269 = vmatpush1.bf16.msra.mxu0 %v259
    %270 = vmatprep.subr.bf16.mxu0 0
    %271 = vmatpush1.bf16.msra.mxu0 %v258
    %272 = vmatprep.subr.bf16.mxu0 0
    %273 = vmatpush1.bf16.msra.mxu0 %v257
    %274 = vmatprep.subr.bf16.mxu0 0
    %275 = vmatpush1.bf16.msra.mxu0 %v256
    %276 = vmatprep.subr.bf16.mxu0 0
    %277 = vmatpush1.bf16.msra.mxu0 %v255
    %278 = vmatprep.subr.bf16.mxu0 0
    %279 = vmatpush1.bf16.msra.mxu0 %v254
    %280 = vmatprep.subr.bf16.mxu0 0
    %281 = vmatpush1.bf16.msra.mxu0 %v253
    %282 = vmatprep.subr.bf16.mxu0 0
    %283 = vmatpush1.bf16.msra.mxu0 %v252
    %284 = vmatprep.subr.bf16.mxu0 0
    %285 = vmatpush2.bf16.msra.mxu0 0
    %286 = vmatprep.subr.bf16.mxu0 0
    %287 = vmatpush2.bf16.msra.mxu0 0
    %288 = vmatprep.subr.bf16.mxu0 0
    %289 = vmatpush2.bf16.msra.mxu0 0
    %290 = vmatprep.subr.bf16.mxu0 0
    %291 = vmatpush2.bf16.msra.mxu0 0
    %292 = vmatprep.subr.bf16.mxu0 0
    %293 = vmatpush2.bf16.msra.mxu0 0
    %294 = vmatprep.subr.bf16.mxu0 0
    %295 = vmatpush2.bf16.msra.mxu0 0
    %296 = vmatprep.subr.bf16.mxu0 0
    %297 = vmatpush2.bf16.msra.mxu0 0
    %298 = vmatprep.subr.bf16.mxu0 0
    %299 = vmatpush2.bf16.msra.mxu0 0
    %300 = vmatprep.mubr.bf16.mxu0 0
    %301 = vmatmul.mubr.bf16.gmra.mxu0 %v213
    %v302 = vpop.f32.mrf.mxu0
    %v303 = vadd.f32 %v218, %v302
    %v304 = vpop.f32.mrf.mxu0
    %v305 = vpop.f32.mrf.mxu0
    %v306 = vpop.f32.mrf.mxu0
    %307 = vdwg.mxu0
    %v308 = vmax.f32 %v303, 0.0
    %v309 = vmul.f32 %v308, %v308
    %v310 = vld [vmem:[#allocation8] sm:$0xf]
    %v311 = vld [vmem:[#allocation8 + $0x4] sm:$0xf]
    %v312 = vld [vmem:[#allocation8 + $0x8] sm:$0xf]
    %v313 = vld [vmem:[#allocation8 + $0xc] sm:$0xf]
    %v314 = vld [vmem:[#allocation8 + $0x10] sm:$0xf]
    %v315 = vld [vmem:[#allocation8 + $0x14] sm:$0xf]
    %v316 = vld [vmem:[#allocation8 + $0x18] sm:$0xf]
    %v317 = vld [vmem:[#allocation8 + $0x1c] sm:$0xf]
    %v318 = vld [vmem:[#allocation8 + $0x20] sm:$0xf]
    %v319 = vld [vmem:[#allocation8 + $0x24] sm:$0xf]
    %v320 = vld [vmem:[#allocation8 + $0x28] sm:$0xf]
    %v321 = vld [vmem:[#allocation8 + $0x2c] sm:$0xf]
    %v322 = vld [vmem:[#allocation8 + $0x30] sm:$0xf]
    %v323 = vld [vmem:[#allocation8 + $0x34] sm:$0xf]
    %v324 = vld [vmem:[#allocation8 + $0x38] sm:$0xf]
    %v325 = vld [vmem:[#allocation8 + $0x3c] sm:$0xf]
    %v326 = vld [vmem:[%s6] sm:$0x1]
    %v327 = vpack.c.bf16 %v309, %v309
    %v329 = vlaneseq
    %v330 = vshrl.u32 %v329, 7
    %v331 = vsub.s32 0, %v330
    %v332 = vrot.slane %v326, %v331
    %v350 = vunpack.c.l.b16 %v310
    %v351 = vunpack.c.l.b16 %v311
    %v352 = vunpack.c.l.b16 %v312
    %v353 = vunpack.c.l.b16 %v313
    %v354 = vunpack.c.l.b16 %v314
    %v355 = vunpack.c.l.b16 %v315
    %v356 = vunpack.c.l.b16 %v316
    %v357 = vunpack.c.l.b16 %v317
    %v358 = vunpack.c.l.b16 %v318
    %v359 = vunpack.c.l.b16 %v319
    %v360 = vunpack.c.l.b16 %v320
    %v361 = vunpack.c.l.b16 %v321
    %v362 = vunpack.c.l.b16 %v322
    %v363 = vunpack.c.l.b16 %v323
    %v364 = vunpack.c.l.b16 %v324
    %v365 = vunpack.c.l.b16 %v325
    %v366 = vpack.c.b16 %v351, %v350
    %v367 = vpack.c.b16 %v353, %v352
    %v368 = vpack.c.b16 %v355, %v354
    %v369 = vpack.c.b16 %v357, %v356
    %v370 = vpack.c.b16 %v359, %v358
    %v371 = vpack.c.b16 %v361, %v360
    %v372 = vpack.c.b16 %v363, %v362
    %v373 = vpack.c.b16 %v365, %v364
    %382 = vmatprep.subr.bf16.mxu0 0
    %383 = vmatpush1.bf16.msra.mxu0 %v373
    %384 = vmatprep.subr.bf16.mxu0 0
    %385 = vmatpush1.bf16.msra.mxu0 %v372
    %386 = vmatprep.subr.bf16.mxu0 0
    %387 = vmatpush1.bf16.msra.mxu0 %v371
    %388 = vmatprep.subr.bf16.mxu0 0
    %389 = vmatpush1.bf16.msra.mxu0 %v370
    %390 = vmatprep.subr.bf16.mxu0 0
    %391 = vmatpush1.bf16.msra.mxu0 %v369
    %392 = vmatprep.subr.bf16.mxu0 0
    %393 = vmatpush1.bf16.msra.mxu0 %v368
    %394 = vmatprep.subr.bf16.mxu0 0
    %395 = vmatpush1.bf16.msra.mxu0 %v367
    %396 = vmatprep.subr.bf16.mxu0 0
    %397 = vmatpush1.bf16.msra.mxu0 %v366
    %398 = vmatprep.subr.bf16.mxu0 0
    %399 = vmatpush2.bf16.msra.mxu0 0
    %400 = vmatprep.subr.bf16.mxu0 0
    %401 = vmatpush2.bf16.msra.mxu0 0
    %402 = vmatprep.subr.bf16.mxu0 0
    %403 = vmatpush2.bf16.msra.mxu0 0
    %404 = vmatprep.subr.bf16.mxu0 0
    %405 = vmatpush2.bf16.msra.mxu0 0
    %406 = vmatprep.subr.bf16.mxu0 0
    %407 = vmatpush2.bf16.msra.mxu0 0
    %408 = vmatprep.subr.bf16.mxu0 0
    %409 = vmatpush2.bf16.msra.mxu0 0
    %410 = vmatprep.subr.bf16.mxu0 0
    %411 = vmatpush2.bf16.msra.mxu0 0
    %412 = vmatprep.subr.bf16.mxu0 0
    %413 = vmatpush2.bf16.msra.mxu0 0
    %414 = vmatprep.mubr.bf16.mxu0 0
    %415 = vmatmul.mubr.bf16.gmra.mxu0 %v327
    %v416 = vpop.f32.mrf.mxu0
    %v417 = vadd.f32 %v332, %v416
    %v418 = vpop.f32.mrf.mxu0
    %v419 = vpop.f32.mrf.mxu0
    %v420 = vpop.f32.mrf.mxu0
    %421 = vdwg.mxu0
    %422 = vst [vmem:[#allocation10] sm:$0xff] %v417
    // Predicated region
    $region46: #{tpu_custom_call.1} parent=1 // pred_check
      _
    $region47: #{tpu_custom_call.1} parent=1 // pred_check_branch
      %424 = sbr.rel (0) target = $region49
    $region48: #{tpu_custom_call.1} parent=1 // pred_region
      %s426 = ssub.s32 128, 128
      %427 = vsyncadd [#allocation4], %s426
      %s429 = sshll.u32 [#allocation10], 4
      %s430 = int_to_ptr.vmem [resolvable:$true] %s429
      %432 = dma.vmem_to_hbm [thread:$0]  %s430, 128, %s7, [#allocation4]
    $region49: #{tpu_custom_call.1} parent=1 // pred_fallthru
      _
    // Predicated region
    $region50: #{tpu_custom_call.1} parent=1 // pred_check
      _
    $region51: #{tpu_custom_call.1} parent=1 // pred_check_branch
      %434 = sbr.rel (0) target = $region53
    $region52: #{tpu_custom_call.1} parent=1 // pred_region
      %435 = dma.done [#allocation4], 128
    $region53: #{tpu_custom_call.1} parent=1 // pred_fallthru
      _
    %436 = vsyncpa [#allocation3], 1
    %437 = vsyncpa [#allocation6], 1
    %438 = vsyncpa [#allocation9], 1
    %439 = vsyncpa [#allocation4], 1

</llo_original>
